<compile_context>
chip_gen: v7x
topology: tpu7x:2x2x1
jax: 0.10.0
libtpu: 0.0.40
codegen_flags: <defaults>
</compile_context>

<pallas_src>
from typing import NamedTuple

import jax
import jax.numpy as jnp
from jax.experimental import pallas as pl
from jax.experimental.pallas import tpu as pltpu


# ---------------------------------------------------------------------------
# Small helpers
# ---------------------------------------------------------------------------

def _round_up(x, m):
    return (x + m - 1) // m * m


def _cdiv(a, b):
    return -(-a // b)


def _pad_cast_2d(a, shape, dtype):
    """Cast (if needed) then zero-pad (if needed) a 2-D array to `shape`.

    No-op (returns the input) when shape and dtype already match, so aligned
    inputs skip the HBM round-trip entirely.
    """
    if a.dtype != dtype:
        a = a.astype(dtype)
    pads = [(0, t - s) for s, t in zip(a.shape, shape)]
    if any(hi for _, hi in pads):
        a = jnp.pad(a, pads)
    return a


# ---------------------------------------------------------------------------
# Parameter preparation (hoisted out of the per-call hot path)
# ---------------------------------------------------------------------------

class PreparedFFN(NamedTuple):
    w1: jax.Array   # (E_pad, H_pad)  fc1 weight, compute dtype, (in, out) layout
    b1: jax.Array   # (1, H_pad)      fc1 bias, f32
    w2: jax.Array   # (H_pad, E_pad)  fc2 weight, compute dtype, (in, out) layout
    b2: jax.Array   # (1, E_pad)      fc2 bias, f32
    E: int          # un-padded embedding dim
    H: int          # un-padded hidden dim


def prepare_ffn_params(w1, b1, w2, b2, compute_dtype=None):
    """Pad + cast the FFN weights ONCE.

    w1: (E, H), b1: (H,), w2: (H, E), b2: (E,) — (in, out) layout.
    compute_dtype: dtype fed to the MXU (bf16 recommended on v5e/v6e/v7x);
    defaults to w1.dtype. Biases stay f32 (epilogue is f32).
    """
    E, H = w1.shape
    if compute_dtype is None:
        compute_dtype = w1.dtype
    E_pad = _round_up(max(E, 128), 128)
    H_pad = _round_up(max(H, 128), 128)
    return PreparedFFN(
        w1=_pad_cast_2d(w1, (E_pad, H_pad), compute_dtype),
        b1=_pad_cast_2d(b1.reshape(1, H), (1, H_pad), jnp.float32),
        w2=_pad_cast_2d(w2, (H_pad, E_pad), compute_dtype),
        b2=_pad_cast_2d(b2.reshape(1, E), (1, E_pad), jnp.float32),
        E=E, H=H)


# ---------------------------------------------------------------------------
# Kernels
# ---------------------------------------------------------------------------

def _ffn_fused_kernel(x_ref, w1_ref, b1_ref, w2_ref, b2_ref, o_ref):
    """Weights fully resident in VMEM (constant index maps); grid = (M tiles,)."""
    h = jnp.dot(x_ref[...], w1_ref[...], preferred_element_type=jnp.float32)
    h = jnp.maximum(h + b1_ref[...], 0.0)
    y = jnp.dot(h.astype(w2_ref.dtype), w2_ref[...],
                preferred_element_type=jnp.float32) + b2_ref[...]
    o_ref[...] = y.astype(o_ref.dtype)


def _ffn_stream_f32out_kernel(x_ref, w1_ref, b1_ref, w2_ref, b2_ref, o_ref):
    """Streaming over H, f32 output: accumulate directly into the output block."""
    @pl.when(pl.program_id(1) == 0)
    def _():
        o_ref[...] = jnp.broadcast_to(b2_ref[...], o_ref.shape)

    h = jnp.dot(x_ref[...], w1_ref[...], preferred_element_type=jnp.float32)
    h = jnp.maximum(h + b1_ref[...], 0.0)
    o_ref[...] += jnp.dot(h.astype(w2_ref.dtype), w2_ref[...],
                          preferred_element_type=jnp.float32)


def _ffn_stream_acc_kernel(x_ref, w1_ref, b1_ref, w2_ref, b2_ref, o_ref, acc_ref):
    """Streaming over H, low-precision output: f32 VMEM scratch accumulator."""
    hi = pl.program_id(1)

    @pl.when(hi == 0)
    def _():
        acc_ref[...] = jnp.broadcast_to(b2_ref[...], acc_ref.shape)

    h = jnp.dot(x_ref[...], w1_ref[...], preferred_element_type=jnp.float32)
    h = jnp.maximum(h + b1_ref[...], 0.0)
    acc_ref[...] += jnp.dot(h.astype(w2_ref.dtype), w2_ref[...],
                            preferred_element_type=jnp.float32)

    @pl.when(hi == pl.num_programs(1) - 1)
    def _():
        o_ref[...] = acc_ref[...].astype(o_ref.dtype)


# ---------------------------------------------------------------------------
# Tiling / VMEM sizing
# ---------------------------------------------------------------------------

def _pick_m_tiling(M, target_tile_m):
    """Pick (tile_m, M_pad). Guarantees >=2 M-tiles when M allows it (so both
    v7x TensorCores get work) and keeps per-tile padding slack < 8 rows."""
    m8 = _round_up(max(M, 8), 8)
    if m8 <= 8:
        return 8, 8
    if m8 <= target_tile_m:
        tm = _round_up(_cdiv(m8, 2), 8)
        return tm, 2 * tm
    n = _cdiv(m8, target_tile_m)
    tm = _round_up(_cdiv(m8, n), 8)
    return tm, n * tm


def _pick_tile_h(H_pad, target):
    """Largest multiple of 128 that divides H_pad and is <= target."""
    target = max(128, (min(int(target), H_pad) // 128) * 128)
    if target >= H_pad:
        return H_pad
    units = H_pad // 128
    best = 1
    for k in range(1, units + 1):
        if units % k == 0 and k * 128 <= target:
            best = k
    return best * 128


def _vmem_estimate(tile_m, tile_h, E_pad, cbytes, obytes, use_acc, n_wbuf):
    est = 2 * tile_m * E_pad * cbytes          # x tiles (double-buffered)
    est += 2 * tile_m * E_pad * obytes         # output tiles
    est += n_wbuf * E_pad * tile_h * cbytes    # w1 buffers
    est += n_wbuf * tile_h * E_pad * cbytes    # w2 buffers
    est += 2 * (tile_h + E_pad) * 4            # bias buffers (f32)
    if use_acc:
        est += tile_m * E_pad * 4              # f32 scratch accumulator
    est += tile_m * tile_h * 4                 # fc1 intermediate (f32)
    return est


# ---------------------------------------------------------------------------
# Wrapper
# ---------------------------------------------------------------------------

def feed_forward_nn(x, params: PreparedFFN, *, tile_m=None, tile_h=None,
                    weight_buffer_count=2, out_dtype=None,
                    fused_vmem_budget_bytes=28 * 1024 * 1024):
    """x: (..., E). params: PreparedFFN from prepare_ffn_params().

    tile_m: target token-tile rows. Defaults: 768 for <=16-bit compute operands,
      512 for f32 (weight-streaming roofline on v6e/v5e; v7x needs less).
    tile_h: None -> collapse the H axis (fused, weights resident) when the fused
      VMEM estimate fits `fused_vmem_budget_bytes`, else stream H in 512-wide
      tiles. An explicit value forces that (rounded-down, divisor-of-H_pad) tile.
    weight_buffer_count: >2 adds pipeline_mode=pl.Buffered(n) on the streamed
      w1/w2 blocks (v6e lever if weight DMA is still exposed after tile_m tuning).
    """
    orig_shape = x.shape
    E = params.E
    assert orig_shape[-1] == E, "last dim of x must equal embedding_dim"
    E_pad, H_pad = params.w1.shape
    cdtype = params.w1.dtype
    cbytes = jnp.dtype(cdtype).itemsize
    if out_dtype is None:
        out_dtype = x.dtype
    obytes = jnp.dtype(out_dtype).itemsize

    x2 = x.reshape(-1, E)
    M = x2.shape[0]

    if tile_m is None:
        tile_m = 768 if cbytes <= 2 else 512
    tile_m, M_pad = _pick_m_tiling(M, max(8, _round_up(int(tile_m), 8)))
    num_m = M_pad // tile_m

    # Fused (weights resident) vs. streaming decision.
    if tile_h is None:
        est_fused = _vmem_estimate(tile_m, H_pad, E_pad, cbytes, obytes,
                                   use_acc=False, n_wbuf=2)
        tile_h = H_pad if est_fused <= fused_vmem_budget_bytes else 512
    tile_h = _pick_tile_h(H_pad, tile_h)
    fused = tile_h == H_pad
    num_h = H_pad // tile_h
    use_acc = (not fused) and (jnp.dtype(out_dtype) != jnp.dtype(jnp.float32))

    x_p = _pad_cast_2d(x2, (M_pad, E_pad), cdtype)

    n_wbuf = max(2, int(weight_buffer_count))
    est = _vmem_estimate(tile_m, tile_h, E_pad, cbytes, obytes, use_acc, n_wbuf)
    # Size the limit from the actual tiles (2x margin + headroom), capped at
    # v7x's 64 MiB physical VMEM instead of a blanket 48 MiB.
    vmem_limit = int(min(64 << 20, max(16 << 20, 2 * est + (2 << 20))))

    if fused:
        grid = (num_m,)
        in_specs = [
            pl.BlockSpec((tile_m, E_pad), lambda i: (i, 0)),   # x tile
            pl.BlockSpec((E_pad, H_pad), lambda i: (0, 0)),    # w1 (DMA'd once)
            pl.BlockSpec((1, H_pad), lambda i: (0, 0)),        # b1
            pl.BlockSpec((H_pad, E_pad), lambda i: (0, 0)),    # w2 (DMA'd once)
            pl.BlockSpec((1, E_pad), lambda i: (0, 0)),        # b2
        ]
        out_spec = pl.BlockSpec((tile_m, E_pad), lambda i: (i, 0))
        scratch = []
        kernel = _ffn_fused_kernel
        dims = ("parallel",)
    else:
        wkw = ({"pipeline_mode": pl.Buffered(n_wbuf)} if n_wbuf > 2 else {})
        grid = (num_m, num_h)
        in_specs = [
            pl.BlockSpec((tile_m, E_pad), lambda i, h: (i, 0)),         # x tile
            pl.BlockSpec((E_pad, tile_h), lambda i, h: (0, h), **wkw),  # w1 H-tile
            pl.BlockSpec((1, tile_h), lambda i, h: (0, h)),             # b1 H-tile
            pl.BlockSpec((tile_h, E_pad), lambda i, h: (h, 0), **wkw),  # w2 H-tile
            pl.BlockSpec((1, E_pad), lambda i, h: (0, 0)),              # b2
        ]
        out_spec = pl.BlockSpec((tile_m, E_pad), lambda i, h: (i, 0))
        dims = ("parallel", "arbitrary")
        if use_acc:
            scratch = [pltpu.VMEM((tile_m, E_pad), jnp.float32)]
            kernel = _ffn_stream_acc_kernel
        else:
            scratch = []
            kernel = _ffn_stream_f32out_kernel

    out = pl.pallas_call(
        kernel,
        out_shape=jax.ShapeDtypeStruct((M_pad, E_pad), out_dtype),
        grid_spec=pltpu.PrefetchScalarGridSpec(
            num_scalar_prefetch=0,
            grid=grid,
            in_specs=in_specs,
            out_specs=out_spec,
            scratch_shapes=scratch,
        ),
        compiler_params=pltpu.CompilerParams(
            dimension_semantics=dims,
            vmem_limit_bytes=vmem_limit,
        ),
    )(x_p, params.w1, params.b1, params.w2, params.b2)

    return out[:M, :E].reshape(orig_shape)


def feed_forward_nn_raw(x, w1, b1, w2, b2, *, compute_dtype=None, **kwargs):
    """Convenience wrapper: prepares (pads/casts) the params on the fly.
    For repeated calls, prefer prepare_ffn_params() once + feed_forward_nn()."""
    return feed_forward_nn(x, prepare_ffn_params(w1, b1, w2, b2, compute_dtype),
                           **kwargs)


# ---------------------------------------------------------------------------
# Reference + init
# ---------------------------------------------------------------------------

def init_params(key, embedding_dim, ff_hidden_dim):
    """Deterministic init mimicking nn.Linear defaults (uniform +/- 1/sqrt(fan_in)).
    Weights stored pre-transposed as (in, out)."""
    k1, k2, k3, k4 = jax.random.split(key, 4)
    lim1 = 1.0 / jnp.sqrt(embedding_dim)
    lim2 = 1.0 / jnp.sqrt(ff_hidden_dim)
    w1 = jax.random.uniform(k1, (embedding_dim, ff_hidden_dim), jnp.float32, -lim1, lim1)
    b1 = jax.random.uniform(k2, (ff_hidden_dim,), jnp.float32, -lim1, lim1)
    w2 = jax.random.uniform(k3, (ff_hidden_dim, embedding_dim), jnp.float32, -lim2, lim2)
    b2 = jax.random.uniform(k4, (embedding_dim,), jnp.float32, -lim2, lim2)
    return w1, b1, w2, b2


def _ref_ffn(x, w1, b1, w2, b2):
    hp = jax.lax.Precision.HIGHEST
    h = jnp.maximum(jnp.dot(x, w1, precision=hp) + b1, 0.0)
    return jnp.dot(h, w2, precision=hp) + b2


# ---------------------------------------------------------------------------
# Self-test
# ---------------------------------------------------------------------------

if __name__ == "__main__":
    key = jax.random.PRNGKey(0)
    kx, kp, kx2, kp2 = jax.random.split(key, 4)

    # Small CLMP-like FFN shapes.
    B, S, E, H = 2, 8, 128, 256
    x = jax.random.normal(kx, (B, S, E), jnp.float32)
    w1, b1, w2, b2 = init_params(kp, E, H)
    ref = _ref_ffn(x, w1, b1, w2, b2)

    # Case 1: fused path (weights resident in VMEM, H axis collapsed), f32.
    p32 = prepare_ffn_params(w1, b1, w2, b2)
    y1 = feed_forward_nn(x, p32)
    jax.block_until_ready(y1)
    assert y1.shape == (B, S, E)
    assert jnp.allclose(y1, ref, atol=1e-3, rtol=1e-3), "fused f32 mismatch"

    # Case 2: ragged / unaligned shapes (E=32, H=64, M=15) -> padding path.
    B2, S2, E2, H2 = 3, 5, 32, 64
    x_r = jax.random.normal(kx2, (B2, S2, E2), jnp.float32)
    w1b, b1b, w2b, b2b = init_params(kp2, E2, H2)
    y2 = feed_forward_nn_raw(x_r, w1b, b1b, w2b, b2b)
    jax.block_until_ready(y2)
    assert y2.shape == (B2, S2, E2)
    assert jnp.allclose(y2, _ref_ffn(x_r, w1b, b1b, w2b, b2b),
                        atol=1e-3, rtol=1e-3), "padded-shape mismatch"

    # Case 3: bf16 MXU operands + f32 accumulate/epilogue (fast path on all chips).
    pbf16 = prepare_ffn_params(w1, b1, w2, b2, compute_dtype=jnp.bfloat16)
    y3 = feed_forward_nn(x, pbf16)
    jax.block_until_ready(y3)
    assert y3.dtype == jnp.float32
    assert jnp.allclose(y3, ref, atol=1e-1, rtol=1e-1), "bf16 fused mismatch"

    # Case 4: forced weight streaming over H, f32 output accumulated directly
    # into the output block (no scratch accumulator).
    y4 = feed_forward_nn(x, p32, tile_h=128)
    jax.block_until_ready(y4)
    assert jnp.allclose(y4, ref, atol=1e-3, rtol=1e-3), "streaming f32 mismatch"

    # Case 5: forced streaming with bf16 output -> f32 scratch accumulator path.
    y5 = feed_forward_nn(x.astype(jnp.bfloat16), pbf16, tile_h=128)
    jax.block_until_ready(y5)
    assert y5.dtype == jnp.bfloat16
    assert jnp.allclose(y5.astype(jnp.float32), ref, atol=2e-1, rtol=2e-1), \
        "streaming bf16 mismatch"

    print("KERNEL_OK")
</pallas_src>

<mosaic_0001>
module attributes {stable_mosaic.version = 11 : i64} {
  func.func @_ffn_fused_kernel(%arg0: i32, %arg1: memref<8x128xf32, #tpu.memory_space<vmem>>, %arg2: memref<128x256xf32, #tpu.memory_space<vmem>>, %arg3: memref<1x256xf32, #tpu.memory_space<vmem>>, %arg4: memref<256x128xf32, #tpu.memory_space<vmem>>, %arg5: memref<1x128xf32, #tpu.memory_space<vmem>>, %arg6: memref<8x128xf32, #tpu.memory_space<vmem>>) attributes {dimension_semantics = [#tpu.dimension_semantics<parallel>], iteration_bounds = array<i64: 2>, scalar_prefetch = 0 : i64, scratch_operands = 0 : i64, tpu.core_type = #tpu.core_type<tc>, window_params = [{transform_indices = @transform_0, window_bounds = array<i64: 8, 128>}, {pipeline_mode = #tpu.pipeline_mode<synchronous>, transform_indices = @transform_1, window_bounds = array<i64: 128, 256>}, {pipeline_mode = #tpu.pipeline_mode<synchronous>, transform_indices = @transform_2, window_bounds = array<i64: 1, 256>}, {pipeline_mode = #tpu.pipeline_mode<synchronous>, transform_indices = @transform_3, window_bounds = array<i64: 256, 128>}, {pipeline_mode = #tpu.pipeline_mode<synchronous>, transform_indices = @transform_4, window_bounds = array<i64: 1, 128>}, {transform_indices = @transform_5, window_bounds = array<i64: 8, 128>}]} {
    %c0 = arith.constant 0 : index
    %c0_0 = arith.constant 0 : index
    %0 = vector.load %arg1[%c0, %c0_0] : memref<8x128xf32, #tpu.memory_space<vmem>>, vector<8x128xf32>
    %c0_1 = arith.constant 0 : index
    %c0_2 = arith.constant 0 : index
    %1 = vector.load %arg2[%c0_1, %c0_2] : memref<128x256xf32, #tpu.memory_space<vmem>>, vector<128x256xf32>
    %cst = arith.constant dense<0.000000e+00> : vector<8x256xf32>
    %2 = tpu.matmul %0, %1, %cst {dimension_numbers = #tpu.dot_dimension_numbers<[1], [0], [0], [1], [0, 0, 1, 1], [], []>} : vector<8x128xf32>, vector<128x256xf32>, vector<8x256xf32> -> vector<8x256xf32>
    %c0_3 = arith.constant 0 : index
    %c0_4 = arith.constant 0 : index
    %3 = vector.load %arg3[%c0_3, %c0_4] : memref<1x256xf32, #tpu.memory_space<vmem>>, vector<1x256xf32>
    %4 = vector.broadcast %3 : vector<1x256xf32> to vector<8x256xf32>
    %5 = arith.addf %2, %4 : vector<8x256xf32>
    %cst_5 = arith.constant 0.000000e+00 : f32
    %6 = vector.broadcast %cst_5 : f32 to vector<8x256xf32>
    %7 = arith.maximumf %5, %6 : vector<8x256xf32>
    %c0_6 = arith.constant 0 : index
    %c0_7 = arith.constant 0 : index
    %8 = vector.load %arg4[%c0_6, %c0_7] : memref<256x128xf32, #tpu.memory_space<vmem>>, vector<256x128xf32>
    %cst_8 = arith.constant dense<0.000000e+00> : vector<8x128xf32>
    %9 = tpu.matmul %7, %8, %cst_8 {dimension_numbers = #tpu.dot_dimension_numbers<[1], [0], [0], [1], [0, 0, 1, 1], [], []>} : vector<8x256xf32>, vector<256x128xf32>, vector<8x128xf32> -> vector<8x128xf32>
    %c0_9 = arith.constant 0 : index
    %c0_10 = arith.constant 0 : index
    %10 = vector.load %arg5[%c0_9, %c0_10] : memref<1x128xf32, #tpu.memory_space<vmem>>, vector<1x128xf32>
    %11 = vector.broadcast %10 : vector<1x128xf32> to vector<8x128xf32>
    %12 = arith.addf %9, %11 : vector<8x128xf32>
    %c0_11 = arith.constant 0 : index
    %c0_12 = arith.constant 0 : index
    %13 = vector.load %arg6[%c0_11, %c0_12] : memref<8x128xf32, #tpu.memory_space<vmem>>, vector<8x128xf32>
    tpu.vector_store %arg6[%c0_11, %c0_12], %12 {strides = array<i32>} : memref<8x128xf32, #tpu.memory_space<vmem>>, vector<8x128xf32>,
    return
  }
  func.func @transform_0(%arg0: i32) -> (i32, i32) {
    %c0_i32 = arith.constant 0 : i32
    %c0_i32_0 = arith.constant 0 : i32
    return %arg0, %c0_i32 : i32, i32
  }
  func.func @transform_1(%arg0: i32) -> (i32, i32) {
    %c0_i32 = arith.constant 0 : i32
    %c0_i32_0 = arith.constant 0 : i32
    %c0_i32_1 = arith.constant 0 : i32
    return %c0_i32, %c0_i32_0 : i32, i32
  }
  func.func @transform_2(%arg0: i32) -> (i32, i32) {
    %c0_i32 = arith.constant 0 : i32
    %c0_i32_0 = arith.constant 0 : i32
    %c0_i32_1 = arith.constant 0 : i32
    return %c0_i32, %c0_i32_0 : i32, i32
  }
  func.func @transform_3(%arg0: i32) -> (i32, i32) {
    %c0_i32 = arith.constant 0 : i32
    %c0_i32_0 = arith.constant 0 : i32
    %c0_i32_1 = arith.constant 0 : i32
    return %c0_i32, %c0_i32_0 : i32, i32
  }
  func.func @transform_4(%arg0: i32) -> (i32, i32) {
    %c0_i32 = arith.constant 0 : i32
    %c0_i32_0 = arith.constant 0 : i32
    %c0_i32_1 = arith.constant 0 : i32
    return %c0_i32, %c0_i32_0 : i32, i32
  }
  func.func @transform_5(%arg0: i32) -> (i32, i32) {
    %c0_i32 = arith.constant 0 : i32
    %c0_i32_0 = arith.constant 0 : i32
    return %arg0, %c0_i32 : i32, i32
  }
}

</mosaic_0001>

<llo_original>
// kernel: tpu_custom_call.1
$region0: #{tpu_custom_call.1}
  #allocation0 [shape = 'u32[]', space=smem, size = 0x4, offset = 0x4, fixed_abs, tag = 'smem constant byte address 0x4 - core index']
  #allocation1 [shape = 'u32[144,128]{1,0:T(1,128)}', space=vmem, size = 0x12000, scoped, tag = 'internal scratch']
  %s0 = inlined_call_operand.hbm [shape: f32[16,128], index: 0, kind: input, shape index: {}]
  %s1 = inlined_call_operand.hbm [shape: f32[128,256], index: 1, kind: input, shape index: {}]
  %s2 = inlined_call_operand.vmem [shape: f32[1,256], index: 2, kind: input, shape index: {}]
  %s3 = inlined_call_operand.hbm [shape: f32[256,128], index: 3, kind: input, shape index: {}]
  %s4 = inlined_call_operand.vmem [shape: f32[1,128], index: 4, kind: input, shape index: {}]
  %s5 = inlined_call_operand.hbm [shape: f32[16,128], index: 5, kind: output, shape index: {}]
  %s6 = sld [smem:[#allocation0]]
  $region65: #{tpu_custom_call.1} parent=0
    _
  %s8 = ssub.s32 1, %s6
  %s9 = scalar_select 0, %s8, %s6
  $region1: #{tpu_custom_call.1} parent=0
    #allocation2 [shape = 'u8[8192]{0}', space=vmem, size = 0x2000, scoped, tag = 'input window, operand 0']
    #allocation3 [shape = 's32[2]{0}', space=sflag, size = 0x8, scoped, tag = 'scoped memory for tpu_custom_call.1']
    #allocation4 [shape = 's32[2]{0}', space=sflag, size = 0x8, scoped, tag = 'scoped memory for tpu_custom_call.1']
    #allocation5 [shape = 'u8[131072]{0}', space=vmem, size = 0x20000, scoped, tag = 'input window, operand 1, single buffered']
    #allocation6 [shape = 's32[1]{0}', space=sflag, size = 0x4, scoped, tag = 'scoped memory for tpu_custom_call.1']
    #allocation7 [shape = 'u8[131072]{0}', space=vmem, size = 0x20000, scoped, tag = 'input window, operand 3, single buffered']
    #allocation8 [shape = 'u8[8192]{0}', space=vmem, size = 0x2000, scoped, tag = 'output window, operand 0']
    %10 = vsyncpa [#allocation3], 0
    %s11 = scalar_lea.sflag [#allocation3], 1
    %12 = vsyncpa %s11, 0
    %13 = vsyncpa [#allocation6], 0
    %14 = vsyncpa [#allocation4], 0
    %s15 = scalar_lea.sflag [#allocation4], 1
    %16 = vsyncpa %s15, 0
    loop: start=0, step=1, limit=4
    $region2: #{tpu_custom_call.1} parent=1 // loop_pre_header
      _
    $region3: #{tpu_custom_call.1} parent=1 // loop_header
      %s18 = sphi 0, %s22
      %p19 = scmp.ge.s32.totalorder %s18, 4
      %s28 = sphi 0, %s30
      %s31 = sphi 0, %s28
      %s32 = sphi 0, %s31
      %s48 = sphi 0, %s32
      %s52 = sphi 0, %s52
      %s54 = sphi 0, %s52
      %s55 = sphi 0, %s54
      %s69 = sphi 0, %s55
      %s73 = sphi 0, %s73
      %s75 = sphi 0, %s73
      %s76 = sphi 0, %s75
      %s90 = sphi 0, %s76
      %s94 = sphi 0, %s94
      %s96 = sphi 0, %s94
      %s97 = sphi 0, %s96
      %s111 = sphi 0, %s97
      %s115 = sphi 0, %s115
      %s117 = sphi 0, %s115
      %s118 = sphi 0, %s117
      %s132 = sphi 0, %s118
      %s138 = sphi 0, %s140
      %s141 = sphi 0, %s138
      %s142 = sphi 0, %s141
      %s158 = sphi 0, %s142
    $region4: #{tpu_custom_call.1} parent=1 // loop_header_branch
      %21 = sbr.rel (%p19) target = $region8
    $region5: #{tpu_custom_call.1} parent=1 // loop_body
      %s23 = ssub.s32 %s18, 1
      %s24 = ssub.s32 %s18, 2
      %s25 = sadd.s32 %s18, 1
      %s26 = ssub.s32 %s18, %s25
      %p27 = scmp.eq.s32.totalorder %s26, 0
      %s29 = sadd.s32 %s28, 1
      %s30 = scalar_select %p27, %s28, %s29
      %p33 = pneg %p27
      %p34 = scmp.eq.s32.totalorder %s18, 1
      %p35 = por %p33, %p34
      %p36 = scmp.ne.s32.totalorder %s28, %s31
      %p37 = scmp.eq.s32.totalorder %s18, 0
      %p38 = por %p36, %p37
      %p39 = scmp.ne.s32.totalorder %s28, %s31
      %p40 = scmp.eq.s32.totalorder %s23, 1
      %p41 = por %p39, %p40
      %p42 = scmp.ne.s32.totalorder %s31, %s32
      %p43 = scmp.eq.s32.totalorder %s23, 0
      %p44 = por %p42, %p43
      %p45 = scmp.ne.s32.totalorder %s31, %s32
      %p46 = scmp.eq.s32.totalorder %s24, 1
      %p47 = por %p45, %p46
      %p49 = scmp.ne.s32.totalorder %s32, %s48
      %p50 = scmp.eq.s32.totalorder %s24, 0
      %p51 = por %p49, %p50
      %s53 = sadd.s32 %s52, 1
      %p56 = scmp.eq.s32.totalorder %s18, 1
      %p57 = scmp.ne.s32.totalorder %s52, %s54
      %p58 = scmp.eq.s32.totalorder %s18, 0
      %p59 = por %p57, %p58
      %p60 = scmp.ne.s32.totalorder %s52, %s54
      %p61 = scmp.eq.s32.totalorder %s23, 1
      %p62 = por %p60, %p61
      %p63 = scmp.ne.s32.totalorder %s54, %s55
      %p64 = scmp.eq.s32.totalorder %s23, 0
      %p65 = por %p63, %p64
      %p66 = scmp.ne.s32.totalorder %s54, %s55
      %p67 = scmp.eq.s32.totalorder %s24, 1
      %p68 = por %p66, %p67
      %p70 = scmp.ne.s32.totalorder %s55, %s69
      %p71 = scmp.eq.s32.totalorder %s24, 0
      %p72 = por %p70, %p71
      %s74 = sadd.s32 %s73, 1
      %p77 = scmp.eq.s32.totalorder %s18, 1
      %p78 = scmp.ne.s32.totalorder %s73, %s75
      %p79 = scmp.eq.s32.totalorder %s18, 0
      %p80 = por %p78, %p79
      %p81 = scmp.ne.s32.totalorder %s73, %s75
      %p82 = scmp.eq.s32.totalorder %s23, 1
      %p83 = por %p81, %p82
      %p84 = scmp.ne.s32.totalorder %s75, %s76
      %p85 = scmp.eq.s32.totalorder %s23, 0
      %p86 = por %p84, %p85
      %p87 = scmp.ne.s32.totalorder %s75, %s76
      %p88 = scmp.eq.s32.totalorder %s24, 1
      %p89 = por %p87, %p88
      %p91 = scmp.ne.s32.totalorder %s76, %s90
      %p92 = scmp.eq.s32.totalorder %s24, 0
      %p93 = por %p91, %p92
      %s95 = sadd.s32 %s94, 1
      %p98 = scmp.eq.s32.totalorder %s18, 1
      %p99 = scmp.ne.s32.totalorder %s94, %s96
      %p100 = scmp.eq.s32.totalorder %s18, 0
      %p101 = por %p99, %p100
      %p102 = scmp.ne.s32.totalorder %s94, %s96
      %p103 = scmp.eq.s32.totalorder %s23, 1
      %p104 = por %p102, %p103
      %p105 = scmp.ne.s32.totalorder %s96, %s97
      %p106 = scmp.eq.s32.totalorder %s23, 0
      %p107 = por %p105, %p106
      %p108 = scmp.ne.s32.totalorder %s96, %s97
      %p109 = scmp.eq.s32.totalorder %s24, 1
      %p110 = por %p108, %p109
      %p112 = scmp.ne.s32.totalorder %s97, %s111
      %p113 = scmp.eq.s32.totalorder %s24, 0
      %p114 = por %p112, %p113
      %s116 = sadd.s32 %s115, 1
      %p119 = scmp.eq.s32.totalorder %s18, 1
      %p120 = scmp.ne.s32.totalorder %s115, %s117
      %p121 = scmp.eq.s32.totalorder %s18, 0
      %p122 = por %p120, %p121
      %p123 = scmp.ne.s32.totalorder %s115, %s117
      %p124 = scmp.eq.s32.totalorder %s23, 1
      %p125 = por %p123, %p124
      %p126 = scmp.ne.s32.totalorder %s117, %s118
      %p127 = scmp.eq.s32.totalorder %s23, 0
      %p128 = por %p126, %p127
      %p129 = scmp.ne.s32.totalorder %s117, %s118
      %p130 = scmp.eq.s32.totalorder %s24, 1
      %p131 = por %p129, %p130
      %p133 = scmp.ne.s32.totalorder %s118, %s132
      %p134 = scmp.eq.s32.totalorder %s24, 0
      %p135 = por %p133, %p134
      %s136 = ssub.s32 %s18, %s25
      %p137 = scmp.eq.s32.totalorder %s136, 0
      %s139 = sadd.s32 %s138, 1
      %s140 = scalar_select %p137, %s138, %s139
      %p143 = pneg %p137
      %p144 = scmp.eq.s32.totalorder %s18, 1
      %p145 = por %p143, %p144
      %p146 = scmp.ne.s32.totalorder %s138, %s141
      %p147 = scmp.eq.s32.totalorder %s18, 0
      %p148 = por %p146, %p147
      %p149 = scmp.ne.s32.totalorder %s138, %s141
      %p150 = scmp.eq.s32.totalorder %s23, 1
      %p151 = por %p149, %p150
      %p152 = scmp.ne.s32.totalorder %s141, %s142
      %p153 = scmp.eq.s32.totalorder %s23, 0
      %p154 = por %p152, %p153
      %p155 = scmp.ne.s32.totalorder %s141, %s142
      %p156 = scmp.eq.s32.totalorder %s24, 1
      %p157 = por %p155, %p156
      %p159 = scmp.ne.s32.totalorder %s142, %s158
      %p160 = scmp.eq.s32.totalorder %s24, 0
      %p161 = por %p159, %p160
      %p162 = scmp.le.s32.totalorder 1, %s18
      %p163 = scmp.lt.s32.totalorder %s18, 3
      %p164 = pnand %p162, %p163
      %p165 = pneg %p164
      // Predicated region
      $region9: #{tpu_custom_call.1} parent=5 // pred_check
        _
      $region10: #{tpu_custom_call.1} parent=5 // pred_check_branch
        %167 = sbr.rel (%p164) target = $region12
      $region11: #{tpu_custom_call.1} parent=5 // pred_region
        %s168 = ssub.s32 %s18, 1
        // Predicated region
        $region13: #{tpu_custom_call.1} parent=11 // pred_check
          %p169 = pneg %p65
        $region14: #{tpu_custom_call.1} parent=11 // pred_check_branch
          %171 = sbr.rel (%p169) target = $region16
        $region15: #{tpu_custom_call.1} parent=11 // pred_region
          %s173 = ssub.s32 4096, 4096
          %174 = vsyncadd [#allocation6], %s173
          %s175 = sshll.u32 [#allocation5], 4
          %s176 = int_to_ptr.vmem [resolvable:$true] %s175
          %181 = dma.hbm_to_vmem [thread:$0]  %s1, 4096, %s176, [#allocation6], 256, 256, 16
        $region16: #{tpu_custom_call.1} parent=11 // pred_fallthru
          _
        // Predicated region
        $region17: #{tpu_custom_call.1} parent=11 // pred_check
          %p182 = pneg %p86
        $region18: #{tpu_custom_call.1} parent=11 // pred_check_branch
          %184 = sbr.rel (%p182) target = $region20
        $region19: #{tpu_custom_call.1} parent=11 // pred_region
          _
        $region20: #{tpu_custom_call.1} parent=11 // pred_fallthru
          _
        // Predicated region
        $region21: #{tpu_custom_call.1} parent=11 // pred_check
          %p185 = pneg %p107
        $region22: #{tpu_custom_call.1} parent=11 // pred_check_branch
          %187 = sbr.rel (%p185) target = $region24
        $region23: #{tpu_custom_call.1} parent=11 // pred_region
          %s189 = ssub.s32 4096, 4096
          %190 = vsyncadd [#allocation6], %s189
          %s191 = sshll.u32 [#allocation7], 4
          %s192 = int_to_ptr.vmem [resolvable:$true] %s191
          %197 = dma.hbm_to_vmem [thread:$0]  %s3, 4096, %s192, [#allocation6], 128, 128, 8
        $region24: #{tpu_custom_call.1} parent=11 // pred_fallthru
          _
        // Predicated region
        $region25: #{tpu_custom_call.1} parent=11 // pred_check
          %p198 = pneg %p128
        $region26: #{tpu_custom_call.1} parent=11 // pred_check_branch
          %200 = sbr.rel (%p198) target = $region28
        $region27: #{tpu_custom_call.1} parent=11 // pred_region
          _
        $region28: #{tpu_custom_call.1} parent=11 // pred_fallthru
          _
      $region12: #{tpu_custom_call.1} parent=5 // pred_fallthru
        _
      %p201 = scmp.lt.s32.totalorder %s18, 2
      // Predicated region
      $region29: #{tpu_custom_call.1} parent=5 // pred_check
        %p202 = pneg %p201
      $region30: #{tpu_custom_call.1} parent=5 // pred_check_branch
        %204 = sbr.rel (%p202) target = $region32
      $region31: #{tpu_custom_call.1} parent=5 // pred_region
        // Predicated region
        $region33: #{tpu_custom_call.1} parent=31 // pred_check
          %p205 = pneg %p38
        $region34: #{tpu_custom_call.1} parent=31 // pred_check_branch
          %207 = sbr.rel (%p205) target = $region36
        $region35: #{tpu_custom_call.1} parent=31 // pred_region
          %s208 = sand.u32 %s28, 1
          %s209 = scalar_lea.sflag [#allocation3], %s208
          %s210 = sand.u32 %s28, 1
          %s211 = smul.addr %s210, 8
          %s212 = scalar_lea.vmem [#allocation2], %s211
          %s214 = ssub.s32 128, 128
          %215 = vsyncadd %s209, %s214
          %s216 = smul.addr %s18, 128
          %s217 = scalar_lea.hbm %s0, %s216
          %s219 = sshll.u32 %s212, 4
          %s220 = int_to_ptr.vmem [resolvable:$true] %s219
          %222 = dma.hbm_to_vmem [thread:$0]  %s217, 128, %s220, %s209
        $region36: #{tpu_custom_call.1} parent=31 // pred_fallthru
          _
      $region32: #{tpu_custom_call.1} parent=5 // pred_fallthru
        _
      %p223 = scmp.le.s32.totalorder 1, %s18
      %p224 = scmp.lt.s32.totalorder %s18, 3
      %p225 = pnand %p223, %p224
      %p226 = pneg %p225
      // Predicated region
      $region37: #{tpu_custom_call.1} parent=5 // pred_check
        _
      $region38: #{tpu_custom_call.1} parent=5 // pred_check_branch
        %228 = sbr.rel (%p225) target = $region40
      $region39: #{tpu_custom_call.1} parent=5 // pred_region
        %s229 = ssub.s32 %s18, 1
        %s230 = sand.u32 %s31, 1
        %s231 = scalar_lea.sflag [#allocation3], %s230
        %s232 = sand.u32 %s31, 1
        %s233 = smul.addr %s232, 8
        %s234 = scalar_lea.vmem [#allocation2], %s233
        // Predicated region
        $region41: #{tpu_custom_call.1} parent=39 // pred_check
          %p235 = pneg %p44
        $region42: #{tpu_custom_call.1} parent=39 // pred_check_branch
          %237 = sbr.rel (%p235) target = $region44
        $region43: #{tpu_custom_call.1} parent=39 // pred_region
          %238 = dma.done %s231, 128
        $region44: #{tpu_custom_call.1} parent=39 // pred_fallthru
          _
        // Predicated region
        $region45: #{tpu_custom_call.1} parent=39 // pred_check
          %p239 = pneg %p65
        $region46: #{tpu_custom_call.1} parent=39 // pred_check_branch
          %241 = sbr.rel (%p239) target = $region48
        $region47: #{tpu_custom_call.1} parent=39 // pred_region
          %242 = dma.done [#allocation6], 4096
        $region48: #{tpu_custom_call.1} parent=39 // pred_fallthru
          _
        // Predicated region
        $region49: #{tpu_custom_call.1} parent=39 // pred_check
          %p243 = pneg %p107
        $region50: #{tpu_custom_call.1} parent=39 // pred_check_branch
          %245 = sbr.rel (%p243) target = $region52
        $region51: #{tpu_custom_call.1} parent=39 // pred_region
          %246 = dma.done [#allocation6], 4096
        $region52: #{tpu_custom_call.1} parent=39 // pred_fallthru
          _
        %s247 = sand.u32 %s31, 1
        %s248 = scalar_lea.sflag [#allocation3], %s247
        %s249 = sand.u32 %s31, 1
        %s250 = smul.addr %s249, 8
        %s251 = scalar_lea.vmem [#allocation2], %s250
        %p252 = pneg %p44
        %p253 = pneg %p41
        %p254 = pneg %p65
        %p255 = pneg %p62
        %p256 = pneg %p86
        %p257 = pneg %p83
        %p258 = pneg %p107
        %p259 = pneg %p104
        %p260 = pneg %p128
        %p261 = pneg %p125
        %p262 = pneg %p154
        %p263 = pneg %p151
        %s264 = sand.u32 %s141, 1
        %s265 = scalar_lea.sflag [#allocation4], %s264
        %s266 = sand.u32 %s141, 1
        %s267 = smul.addr %s266, 8
        %s268 = scalar_lea.vmem [#allocation8], %s267
        %v269 = vld [vmem:[%s234] sm:$0xff]
        %v270 = vld [vmem:[#allocation5] sm:$0xff]
        %v271 = vld [vmem:[#allocation5 + $0x8] sm:$0xff]
        %v272 = vld [vmem:[#allocation5 + $0x10] sm:$0xff]
        %v273 = vld [vmem:[#allocation5 + $0x18] sm:$0xff]
        %v274 = vld [vmem:[#allocation5 + $0x20] sm:$0xff]
        %v275 = vld [vmem:[#allocation5 + $0x28] sm:$0xff]
        %v276 = vld [vmem:[#allocation5 + $0x30] sm:$0xff]
        %v277 = vld [vmem:[#allocation5 + $0x38] sm:$0xff]
        %v278 = vld [vmem:[#allocation5 + $0x40] sm:$0xff]
        %v279 = vld [vmem:[#allocation5 + $0x48] sm:$0xff]
        %v280 = vld [vmem:[#allocation5 + $0x50] sm:$0xff]
        %v281 = vld [vmem:[#allocation5 + $0x58] sm:$0xff]
        %v282 = vld [vmem:[#allocation5 + $0x60] sm:$0xff]
        %v283 = vld [vmem:[#allocation5 + $0x68] sm:$0xff]
        %v284 = vld [vmem:[#allocation5 + $0x70] sm:$0xff]
        %v285 = vld [vmem:[#allocation5 + $0x78] sm:$0xff]
        %v286 = vld [vmem:[#allocation5 + $0x80] sm:$0xff]
        %v287 = vld [vmem:[#allocation5 + $0x88] sm:$0xff]
        %v288 = vld [vmem:[#allocation5 + $0x90] sm:$0xff]
        %v289 = vld [vmem:[#allocation5 + $0x98] sm:$0xff]
        %v290 = vld [vmem:[#allocation5 + $0xa0] sm:$0xff]
        %v291 = vld [vmem:[#allocation5 + $0xa8] sm:$0xff]
        %v292 = vld [vmem:[#allocation5 + $0xb0] sm:$0xff]
        %v293 = vld [vmem:[#allocation5 + $0xb8] sm:$0xff]
        %v294 = vld [vmem:[#allocation5 + $0xc0] sm:$0xff]
        %v295 = vld [vmem:[#allocation5 + $0xc8] sm:$0xff]
        %v296 = vld [vmem:[#allocation5 + $0xd0] sm:$0xff]
        %v297 = vld [vmem:[#allocation5 + $0xd8] sm:$0xff]
        %v298 = vld [vmem:[#allocation5 + $0xe0] sm:$0xff]
        %v299 = vld [vmem:[#allocation5 + $0xe8] sm:$0xff]
        %v300 = vld [vmem:[#allocation5 + $0xf0] sm:$0xff]
        %v301 = vld [vmem:[#allocation5 + $0xf8] sm:$0xff]
        %v302 = vld [vmem:[%s2] sm:$0x3]
        %v304 = vlaneseq
        %v305 = vshrl.u32 %v304, 7
        %v306 = vsub.s32 0, %v305
        %v307 = vrot.slane %v302, %v306
        %v308 = vlaneseq
        %v309 = vshrl.u32 %v308, 7
        %v310 = vsub.s32 1, %v309
        %v311 = vrot.slane %v302, %v310
        %314 = vmatprep.subr.mxu0 %v271
        %315 = vmatpush1.msra.mxu0 %v270
        %316 = vmatprep.subr.mxu0 %v273
        %317 = vmatpush1.msra.mxu0 %v272
        %318 = vmatprep.subr.mxu0 %v275
        %319 = vmatpush1.msra.mxu0 %v274
        %320 = vmatprep.subr.mxu0 %v277
        %321 = vmatpush1.msra.mxu0 %v276
        %322 = vmatprep.subr.mxu0 %v279
        %323 = vmatpush1.msra.mxu0 %v278
        %324 = vmatprep.subr.mxu0 %v281
        %325 = vmatpush1.msra.mxu0 %v280
        %326 = vmatprep.subr.mxu0 %v283
        %327 = vmatpush1.msra.mxu0 %v282
        %328 = vmatprep.subr.mxu0 %v285
        %329 = vmatpush1.msra.mxu0 %v284
        %330 = vmatprep.subr.mxu0 %v287
        %331 = vmatpush1.msra.mxu0 %v286
        %332 = vmatprep.subr.mxu0 %v289
        %333 = vmatpush1.msra.mxu0 %v288
        %334 = vmatprep.subr.mxu0 %v291
        %335 = vmatpush1.msra.mxu0 %v290
        %336 = vmatprep.subr.mxu0 %v293
        %337 = vmatpush1.msra.mxu0 %v292
        %338 = vmatprep.subr.mxu0 %v295
        %339 = vmatpush1.msra.mxu0 %v294
        %340 = vmatprep.subr.mxu0 %v297
        %341 = vmatpush1.msra.mxu0 %v296
        %342 = vmatprep.subr.mxu0 %v299
        %343 = vmatpush1.msra.mxu0 %v298
        %344 = vmatprep.subr.mxu0 %v301
        %345 = vmatpush1.msra.mxu0 %v300
        %346 = vmatprep.subr.mxu0 0.0
        %347 = vmatpush1.msra.mxu0 0.0
        %348 = vmatprep.subr.mxu0 0.0
        %349 = vmatpush1.msra.mxu0 0.0
        %350 = vmatprep.subr.mxu0 0.0
        %351 = vmatpush1.msra.mxu0 0.0
        %352 = vmatprep.subr.mxu0 0.0
        %353 = vmatpush1.msra.mxu0 0.0
        %354 = vmatprep.subr.mxu0 0.0
        %355 = vmatpush1.msra.mxu0 0.0
        %356 = vmatprep.subr.mxu0 0.0
        %357 = vmatpush1.msra.mxu0 0.0
        %358 = vmatprep.subr.mxu0 0.0
        %359 = vmatpush1.msra.mxu0 0.0
        %360 = vmatprep.subr.mxu0 0.0
        %361 = vmatpush1.msra.mxu0 0.0
        %362 = vmatprep.subr.mxu0 0.0
        %363 = vmatpush1.msra.mxu0 0.0
        %364 = vmatprep.subr.mxu0 0.0
        %365 = vmatpush1.msra.mxu0 0.0
        %366 = vmatprep.subr.mxu0 0.0
        %367 = vmatpush1.msra.mxu0 0.0
        %368 = vmatprep.subr.mxu0 0.0
        %369 = vmatpush1.msra.mxu0 0.0
        %370 = vmatprep.subr.mxu0 0.0
        %371 = vmatpush1.msra.mxu0 0.0
        %372 = vmatprep.subr.mxu0 0.0
        %373 = vmatpush1.msra.mxu0 0.0
        %374 = vmatprep.subr.mxu0 0.0
        %375 = vmatpush1.msra.mxu0 0.0
        %376 = vmatprep.subr.mxu0 0.0
        %377 = vmatpush1.msra.mxu0 0.0
        %378 = vmatprep.mubr.f32.mxu0 0.0
        %379 = vmatmul.mubr.f32.gmra.mrb[0].mxu0 %v269
        %v380 = vpop.f32.mrb[0].mxu0
        %v381 = vadd.f32 %v307, %v380
        %v382 = vpop.f32.mrb[0].mxu0
        %v383 = vadd.f32 %v311, %v382
        %384 = vdwg.mxu0
        %v385 = vmax.f32 %v381, 0.0
        %v386 = vmax.f32 %v383, 0.0
        %v387 = vld [vmem:[#allocation7] sm:$0xff]
        %v388 = vld [vmem:[#allocation7 + $0x8] sm:$0xff]
        %v389 = vld [vmem:[#allocation7 + $0x10] sm:$0xff]
        %v390 = vld [vmem:[#allocation7 + $0x18] sm:$0xff]
        %v391 = vld [vmem:[#allocation7 + $0x20] sm:$0xff]
        %v392 = vld [vmem:[#allocation7 + $0x28] sm:$0xff]
        %v393 = vld [vmem:[#allocation7 + $0x30] sm:$0xff]
        %v394 = vld [vmem:[#allocation7 + $0x38] sm:$0xff]
        %v395 = vld [vmem:[#allocation7 + $0x40] sm:$0xff]
        %v396 = vld [vmem:[#allocation7 + $0x48] sm:$0xff]
        %v397 = vld [vmem:[#allocation7 + $0x50] sm:$0xff]
        %v398 = vld [vmem:[#allocation7 + $0x58] sm:$0xff]
        %v399 = vld [vmem:[#allocation7 + $0x60] sm:$0xff]
        %v400 = vld [vmem:[#allocation7 + $0x68] sm:$0xff]
        %v401 = vld [vmem:[#allocation7 + $0x70] sm:$0xff]
        %v402 = vld [vmem:[#allocation7 + $0x78] sm:$0xff]
        %v403 = vld [vmem:[#allocation7 + $0x80] sm:$0xff]
        %v404 = vld [vmem:[#allocation7 + $0x88] sm:$0xff]
        %v405 = vld [vmem:[#allocation7 + $0x90] sm:$0xff]
        %v406 = vld [vmem:[#allocation7 + $0x98] sm:$0xff]
        %v407 = vld [vmem:[#allocation7 + $0xa0] sm:$0xff]
        %v408 = vld [vmem:[#allocation7 + $0xa8] sm:$0xff]
        %v409 = vld [vmem:[#allocation7 + $0xb0] sm:$0xff]
        %v410 = vld [vmem:[#allocation7 + $0xb8] sm:$0xff]
        %v411 = vld [vmem:[#allocation7 + $0xc0] sm:$0xff]
        %v412 = vld [vmem:[#allocation7 + $0xc8] sm:$0xff]
        %v413 = vld [vmem:[#allocation7 + $0xd0] sm:$0xff]
        %v414 = vld [vmem:[#allocation7 + $0xd8] sm:$0xff]
        %v415 = vld [vmem:[#allocation7 + $0xe0] sm:$0xff]
        %v416 = vld [vmem:[#allocation7 + $0xe8] sm:$0xff]
        %v417 = vld [vmem:[#allocation7 + $0xf0] sm:$0xff]
        %v418 = vld [vmem:[#allocation7 + $0xf8] sm:$0xff]
        %v419 = vld [vmem:[%s4] sm:$0x1]
        %v421 = vlaneseq
        %v422 = vshrl.u32 %v421, 7
        %v423 = vsub.s32 0, %v422
        %v424 = vrot.slane %v419, %v423
        %426 = vmatprep.subr.mxu0 0.0
        %427 = vmatpush1.msra.mxu0 %v387
        %428 = vmatprep.subr.mxu0 0.0
        %429 = vmatpush1.msra.mxu0 %v388
        %430 = vmatprep.subr.mxu0 0.0
        %431 = vmatpush1.msra.mxu0 %v389
        %432 = vmatprep.subr.mxu0 0.0
        %433 = vmatpush1.msra.mxu0 %v390
        %434 = vmatprep.subr.mxu0 0.0
        %435 = vmatpush1.msra.mxu0 %v391
        %436 = vmatprep.subr.mxu0 0.0
        %437 = vmatpush1.msra.mxu0 %v392
        %438 = vmatprep.subr.mxu0 0.0
        %439 = vmatpush1.msra.mxu0 %v393
        %440 = vmatprep.subr.mxu0 0.0
        %441 = vmatpush1.msra.mxu0 %v394
        %442 = vmatprep.subr.mxu0 0.0
        %443 = vmatpush1.msra.mxu0 %v395
        %444 = vmatprep.subr.mxu0 0.0
        %445 = vmatpush1.msra.mxu0 %v396
        %446 = vmatprep.subr.mxu0 0.0
        %447 = vmatpush1.msra.mxu0 %v397
        %448 = vmatprep.subr.mxu0 0.0
        %449 = vmatpush1.msra.mxu0 %v398
        %450 = vmatprep.subr.mxu0 0.0
        %451 = vmatpush1.msra.mxu0 %v399
        %452 = vmatprep.subr.mxu0 0.0
        %453 = vmatpush1.msra.mxu0 %v400
        %454 = vmatprep.subr.mxu0 0.0
        %455 = vmatpush1.msra.mxu0 %v401
        %456 = vmatprep.subr.mxu0 0.0
        %457 = vmatpush1.msra.mxu0 %v402
        %458 = vmatprep.subr.mxu0 0.0
        %459 = vmatpush1.msra.mxu0 %v403
        %460 = vmatprep.subr.mxu0 0.0
        %461 = vmatpush1.msra.mxu0 %v404
        %462 = vmatprep.subr.mxu0 0.0
        %463 = vmatpush1.msra.mxu0 %v405
        %464 = vmatprep.subr.mxu0 0.0
        %465 = vmatpush1.msra.mxu0 %v406
        %466 = vmatprep.subr.mxu0 0.0
        %467 = vmatpush1.msra.mxu0 %v407
        %468 = vmatprep.subr.mxu0 0.0
        %469 = vmatpush1.msra.mxu0 %v408
        %470 = vmatprep.subr.mxu0 0.0
        %471 = vmatpush1.msra.mxu0 %v409
        %472 = vmatprep.subr.mxu0 0.0
        %473 = vmatpush1.msra.mxu0 %v410
        %474 = vmatprep.subr.mxu0 0.0
        %475 = vmatpush1.msra.mxu0 %v411
        %476 = vmatprep.subr.mxu0 0.0
        %477 = vmatpush1.msra.mxu0 %v412
        %478 = vmatprep.subr.mxu0 0.0
        %479 = vmatpush1.msra.mxu0 %v413
        %480 = vmatprep.subr.mxu0 0.0
        %481 = vmatpush1.msra.mxu0 %v414
        %482 = vmatprep.subr.mxu0 0.0
        %483 = vmatpush1.msra.mxu0 %v415
        %484 = vmatprep.subr.mxu0 0.0
        %485 = vmatpush1.msra.mxu0 %v416
        %486 = vmatprep.subr.mxu0 0.0
        %487 = vmatpush1.msra.mxu0 %v417
        %488 = vmatprep.subr.mxu0 0.0
        %489 = vmatpush1.msra.mxu0 %v418
        %490 = vmatprep.mubr.f32.mxu0 %v386
        %491 = vmatmul.mubr.f32.gmra.mrb[0].mxu0 %v385
        %v492 = vpop.f32.mrb[0].mxu0
        %v493 = vadd.f32 %v424, %v492
        %v494 = vpop.f32.mrb[0].mxu0
        %495 = vdwg.mxu0
        %496 = vst [vmem:[%s268] sm:$0xff] %v493
        %s497 = sand.u32 %s141, 1
        %s498 = scalar_lea.sflag [#allocation4], %s497
        %s499 = sand.u32 %s141, 1
        %s500 = smul.addr %s499, 8
        %s501 = scalar_lea.vmem [#allocation8], %s500
        // Predicated region
        $region53: #{tpu_custom_call.1} parent=39 // pred_check
          %p502 = pneg %p151
        $region54: #{tpu_custom_call.1} parent=39 // pred_check_branch
          %504 = sbr.rel (%p502) target = $region56
        $region55: #{tpu_custom_call.1} parent=39 // pred_region
          %s506 = ssub.s32 128, 128
          %507 = vsyncadd %s498, %s506
          %s508 = smul.addr %s23, 128
          %s509 = scalar_lea.hbm %s5, %s508
          %s511 = sshll.u32 %s501, 4
          %s512 = int_to_ptr.vmem [resolvable:$true] %s511
          %514 = dma.vmem_to_hbm [thread:$0]  %s512, 128, %s509, %s498
        $region56: #{tpu_custom_call.1} parent=39 // pred_fallthru
          _
      $region40: #{tpu_custom_call.1} parent=5 // pred_fallthru
        _
      %p515 = scmp.le.s32.totalorder 2, %s18
      // Predicated region
      $region57: #{tpu_custom_call.1} parent=5 // pred_check
        %p516 = pneg %p515
      $region58: #{tpu_custom_call.1} parent=5 // pred_check_branch
        %518 = sbr.rel (%p516) target = $region60
      $region59: #{tpu_custom_call.1} parent=5 // pred_region
        %s519 = ssub.s32 %s18, 2
        // Predicated region
        $region61: #{tpu_custom_call.1} parent=59 // pred_check
          %p520 = pneg %p157
        $region62: #{tpu_custom_call.1} parent=59 // pred_check_branch
          %522 = sbr.rel (%p520) target = $region64
        $region63: #{tpu_custom_call.1} parent=59 // pred_region
          %s523 = sand.u32 %s142, 1
          %s524 = scalar_lea.sflag [#allocation4], %s523
          %s525 = sand.u32 %s142, 1
          %s526 = smul.addr %s525, 8
          %s527 = scalar_lea.vmem [#allocation8], %s526
          %528 = dma.done %s524, 128
        $region64: #{tpu_custom_call.1} parent=59 // pred_fallthru
          _
      $region60: #{tpu_custom_call.1} parent=5 // pred_fallthru
        _
    $region6: #{tpu_custom_call.1} parent=1 // loop_footer
      %s22 = sadd.s32 1, %s18
    $region7: #{tpu_custom_call.1} parent=1 // loop_footer_branch
      %17 = sbr.rel target = $region3
    $region8: #{tpu_custom_call.1} parent=1 // loop_exit
      _
    %529 = vsyncpa [#allocation3], 1
    %s530 = scalar_lea.sflag [#allocation3], 1
    %531 = vsyncpa %s530, 1
    %532 = vsyncpa [#allocation6], 1
    %533 = vsyncpa [#allocation4], 1
    %s534 = scalar_lea.sflag [#allocation4], 1
    %535 = vsyncpa %s534, 1

</llo_original>
